<compile_context>
chip_gen: v5e
topology: v5e:2x2
jax: 0.10.0
libtpu: 0.0.40
codegen_flags: <defaults>
</compile_context>

<pallas_src>
from functools import partial

import jax
import jax.numpy as jnp
from jax.experimental import pallas as pl
from jax.experimental.pallas import tpu as pltpu


def _naver_kernel(decay, T, B, E, C, H,
                  x_ref, cate_ref, lens_ref,
                  w_ih_ref, w_hh_ref, b_ref,
                  lin_w_ref, lin_b_ref,
                  out_ref,
                  gx_sc, hpc_sc):
    one_minus = 1.0 - decay

    # ---------------- phase 1: batched input projection (off the serial path) ----
    # Native layout x_ref is (B, T*E); gather time-major rows r = t*B + b with
    # static lane slices + a sublane concat, then ONE matmul:
    #   gx[t*B + b] = x[b, t] @ W_ih^T + (b_ih + b_hh)          shape (T*B, 4H)
    xv = x_ref[...]                                            # (B, T*E)
    x_tm = jnp.concatenate([xv[:, t * E:(t + 1) * E] for t in range(T)], axis=0)
    gx_sc[...] = (jnp.dot(x_tm, w_ih_ref[...],
                          preferred_element_type=jnp.float32)
                  + b_ref[...])

    # ---------------- phase 2: serial LSTM recurrence, fully unrolled over T -----
    cv = cate_ref[...]                                         # (B, T*C), 1 vreg
    h = jnp.zeros((B, H), jnp.float32)
    c = jnp.zeros((B, H), jnp.float32)
    pc = None                                                  # decayed cate pref (B, C)

    for t in range(T):
        r0 = t * B
        gates = gx_sc[r0:r0 + B, :]                            # (B, 4H)
        if t > 0:
            gates = gates + jnp.dot(h, w_hh_ref[...],
                                    preferred_element_type=jnp.float32)
        # PyTorch LSTMCell gate order: i, f, g, o.
        # One full-vreg sigmoid + one full-vreg tanh instead of 4 partial passes.
        sg = jax.nn.sigmoid(gates)
        tg = jnp.tanh(gates)
        i_g = sg[:, 0:H]
        f_g = sg[:, H:2 * H]
        g_g = tg[:, 2 * H:3 * H]
        o_g = sg[:, 3 * H:4 * H]
        c = f_g * c + i_g * g_g
        h = o_g * jnp.tanh(c)

        cate_t = cv[:, t * C:(t + 1) * C]                      # (B, C)
        pc = cate_t if t == 0 else pc * decay + cate_t * one_minus

        # single merged staging store per step: [h | pc] -> (B, H+C)
        hpc_sc[r0:r0 + B, :] = jnp.concatenate([h, pc], axis=1)

    # ---------------- phase 3: batched output Linear + in-kernel packed mask -----
    # One fused matmul over the [h | pc] slab, then mask (NaN-safe) and assemble a
    # lane-dense (B, T*E) output (row-major identical to (B, T, E)).
    proj = jnp.dot(hpc_sc[...], lin_w_ref[...],
                   preferred_element_type=jnp.float32)         # (T*B, E)
    lens = lens_ref[...]                                       # (B, 1) int32
    bias = lin_b_ref[...]                                      # (1, E)
    pieces = []
    for t in range(T):
        keep = lens > t                                        # (B, 1) bool
        pieces.append(jnp.where(keep, proj[t * B:(t + 1) * B, :], 0.0) + bias)
    out_ref[...] = jnp.concatenate(pieces, axis=1)             # (B, T*E)


def prepare_params(params):
    """One-time parameter plumbing (keep out of the per-call path)."""
    return {
        "w_ih_t": params["w_ih"].T.astype(jnp.float32),                      # (E, 4H)
        "w_hh_t": params["w_hh"].T.astype(jnp.float32),                      # (H, 4H)
        "b": (params["b_ih"] + params["b_hh"])[None, :].astype(jnp.float32), # (1, 4H)
        "lin_w_t": params["lin_w"].T.astype(jnp.float32),                    # (H+C, E)
        "lin_b": params["lin_b"][None, :].astype(jnp.float32),               # (1, E)
    }


@partial(jax.jit, static_argnames=("decay",))
def naver_forward(x, cate, seq_lens, prepared, decay):
    """x: (B, T, E), cate: (B, T, C), seq_lens: (B,) int32 (descending, as pack() requires)."""
    B, T, E = x.shape
    C = cate.shape[-1]
    H = prepared["w_hh_t"].shape[0]

    # Free, layout-preserving reshapes (no transposes / copies in the wrapper).
    x2d = x.reshape(B, T * E).astype(jnp.float32)
    cate2d = cate.reshape(B, T * C).astype(jnp.float32)
    lens2d = seq_lens.reshape(B, 1).astype(jnp.int32)

    kernel = partial(_naver_kernel, float(decay), T, B, E, C, H)
    vmem = pl.BlockSpec(memory_space=pltpu.MemorySpace.VMEM)

    flops = (2 * T * B * E * (4 * H)          # input projection
             + 2 * (T - 1) * B * H * (4 * H)  # recurrent matmuls
             + 2 * T * B * (H + C) * E)       # output projection
    transcendentals = T * B * (4 * H + 4 * H + H)
    bytes_accessed = 4 * (B * T * E + B * T * C + B
                          + E * 4 * H + H * 4 * H + 4 * H
                          + (H + C) * E + E
                          + B * T * E)

    out2d = pl.pallas_call(
        kernel,
        out_shape=jax.ShapeDtypeStruct((B, T * E), jnp.float32),
        in_specs=[vmem] * 8,
        out_specs=vmem,
        scratch_shapes=[
            pltpu.VMEM((T * B, 4 * H), jnp.float32),    # hoisted input projection
            pltpu.VMEM((T * B, H + C), jnp.float32),    # staged [h | cate_pref] slab
        ],
        compiler_params=pltpu.CompilerParams(vmem_limit_bytes=32 * 1024 * 1024),
        cost_estimate=pl.CostEstimate(flops=flops,
                                      transcendentals=transcendentals,
                                      bytes_accessed=bytes_accessed),
    )(x2d, cate2d, lens2d,
      prepared["w_ih_t"], prepared["w_hh_t"], prepared["b"],
      prepared["lin_w_t"], prepared["lin_b"])

    return out2d.reshape(B, T, E)


def naver_forward_ref(x, cate, seq_lens, params, decay):
    """Pure-JAX reference of the PyTorch forward (packed sequences via masking)."""
    B, T, E = x.shape
    C = cate.shape[-1]
    H = params["w_hh"].shape[1]
    h = jnp.zeros((B, H), jnp.float32)
    c = jnp.zeros((B, H), jnp.float32)
    pc = jnp.zeros((B, C), jnp.float32)
    bias = params["b_ih"] + params["b_hh"]
    outs = []
    for t in range(T):
        m = (t < seq_lens).astype(jnp.float32)[:, None]
        ce = cate[:, t] if t == 0 else pc * decay + cate[:, t] * (1.0 - decay)
        gates = x[:, t] @ params["w_ih"].T + h @ params["w_hh"].T + bias
        i_g = jax.nn.sigmoid(gates[:, 0:H])
        f_g = jax.nn.sigmoid(gates[:, H:2 * H])
        g_g = jnp.tanh(gates[:, 2 * H:3 * H])
        o_g = jnp.tanh(gates[:, 3 * H:4 * H]) * 0 + jax.nn.sigmoid(gates[:, 3 * H:4 * H])
        c_new = f_g * c + i_g * g_g
        h_new = o_g * jnp.tanh(c_new)
        h = jnp.where(m > 0, h_new, h)
        c = jnp.where(m > 0, c_new, c)
        pc = jnp.where(m > 0, ce, pc)
        concat = jnp.concatenate([h_new, ce], axis=1) * m
        outs.append(concat @ params["lin_w"].T + params["lin_b"])
    return jnp.stack(outs, axis=1)


if __name__ == "__main__":
    # sizes implied by the module: embed_size=E, hidden_size=H, cate_dim=C
    B, T, E, H, C = 8, 8, 32, 32, 16
    decay = 0.7

    key = jax.random.PRNGKey(0)
    kx, kc, k1, k2, k3, k4, k5, k6 = jax.random.split(key, 8)

    x = jax.random.normal(kx, (B, T, E), jnp.float32)
    cate = jax.random.uniform(kc, (B, T, C), jnp.float32)
    # pack_padded_sequence requires lengths sorted in decreasing order (prefix masks)
    seq_lens = jnp.array([8, 8, 7, 6, 5, 4, 3, 2], jnp.int32)

    params = {
        "w_ih": 0.1 * jax.random.normal(k1, (4 * H, E), jnp.float32),   # LSTMCell weight_ih
        "w_hh": 0.1 * jax.random.normal(k2, (4 * H, H), jnp.float32),   # LSTMCell weight_hh
        "b_ih": 0.1 * jax.random.normal(k3, (4 * H,), jnp.float32),
        "b_hh": 0.1 * jax.random.normal(k4, (4 * H,), jnp.float32),
        "lin_w": 0.1 * jax.random.normal(k5, (E, H + C), jnp.float32),  # Linear(H+C -> E)
        "lin_b": 0.1 * jax.random.normal(k6, (E,), jnp.float32),
    }
    prepared = prepare_params(params)

    out = jax.block_until_ready(naver_forward(x, cate, seq_lens, prepared, decay=decay))
    ref = jax.block_until_ready(naver_forward_ref(x, cate, seq_lens, params, decay))

    assert out.shape == (B, T, E)
    assert jnp.allclose(out, ref, atol=1e-5, rtol=1e-5), float(jnp.max(jnp.abs(out - ref)))
    print("KERNEL_OK")
</pallas_src>

<mosaic_0001>
module attributes {stable_mosaic.version = 11 : i64} {
  func.func @_naver_kernel(%arg0: memref<8x256xf32, #tpu.memory_space<vmem>>, %arg1: memref<8x128xf32, #tpu.memory_space<vmem>>, %arg2: memref<8x1xi32, #tpu.memory_space<vmem>>, %arg3: memref<32x128xf32, #tpu.memory_space<vmem>>, %arg4: memref<32x128xf32, #tpu.memory_space<vmem>>, %arg5: memref<1x128xf32, #tpu.memory_space<vmem>>, %arg6: memref<48x32xf32, #tpu.memory_space<vmem>>, %arg7: memref<1x32xf32, #tpu.memory_space<vmem>>, %arg8: memref<8x256xf32, #tpu.memory_space<vmem>>, %arg9: memref<64x128xf32, #tpu.memory_space<vmem>>, %arg10: memref<64x48xf32, #tpu.memory_space<vmem>>) attributes {dimension_semantics = [], scalar_prefetch = 0 : i64, scratch_operands = 2 : i64, tpu.core_type = #tpu.core_type<tc>} {
    %c0 = arith.constant 0 : index
    %c0_0 = arith.constant 0 : index
    %0 = vector.load %arg0[%c0, %c0_0] : memref<8x256xf32, #tpu.memory_space<vmem>>, vector<8x256xf32>
    %1 = vector.extract_strided_slice %0 {offsets = [0, 0], sizes = [8, 32], strides = [1, 1]} : vector<8x256xf32> to vector<8x32xf32>
    %2 = vector.extract_strided_slice %0 {offsets = [0, 32], sizes = [8, 32], strides = [1, 1]} : vector<8x256xf32> to vector<8x32xf32>
    %3 = vector.extract_strided_slice %0 {offsets = [0, 64], sizes = [8, 32], strides = [1, 1]} : vector<8x256xf32> to vector<8x32xf32>
    %4 = vector.extract_strided_slice %0 {offsets = [0, 96], sizes = [8, 32], strides = [1, 1]} : vector<8x256xf32> to vector<8x32xf32>
    %5 = vector.extract_strided_slice %0 {offsets = [0, 128], sizes = [8, 32], strides = [1, 1]} : vector<8x256xf32> to vector<8x32xf32>
    %6 = vector.extract_strided_slice %0 {offsets = [0, 160], sizes = [8, 32], strides = [1, 1]} : vector<8x256xf32> to vector<8x32xf32>
    %7 = vector.extract_strided_slice %0 {offsets = [0, 192], sizes = [8, 32], strides = [1, 1]} : vector<8x256xf32> to vector<8x32xf32>
    %8 = vector.extract_strided_slice %0 {offsets = [0, 224], sizes = [8, 32], strides = [1, 1]} : vector<8x256xf32> to vector<8x32xf32>
    %9 = tpu.concatenate %1, %2, %3, %4, %5, %6, %7, %8 in 0 : vector<8x32xf32>, vector<8x32xf32>, vector<8x32xf32>, vector<8x32xf32>, vector<8x32xf32>, vector<8x32xf32>, vector<8x32xf32>, vector<8x32xf32> -> vector<64x32xf32>
    %c0_1 = arith.constant 0 : index
    %c0_2 = arith.constant 0 : index
    %10 = vector.load %arg3[%c0_1, %c0_2] : memref<32x128xf32, #tpu.memory_space<vmem>>, vector<32x128xf32>
    %cst = arith.constant dense<0.000000e+00> : vector<64x128xf32>
    %11 = tpu.matmul %9, %10, %cst {dimension_numbers = #tpu.dot_dimension_numbers<[1], [0], [0], [1], [0, 0, 1, 1], [], []>} : vector<64x32xf32>, vector<32x128xf32>, vector<64x128xf32> -> vector<64x128xf32>
    %c0_3 = arith.constant 0 : index
    %c0_4 = arith.constant 0 : index
    %12 = vector.load %arg5[%c0_3, %c0_4] : memref<1x128xf32, #tpu.memory_space<vmem>>, vector<1x128xf32>
    %13 = vector.broadcast %12 : vector<1x128xf32> to vector<64x128xf32>
    %14 = arith.addf %11, %13 : vector<64x128xf32>
    %c0_5 = arith.constant 0 : index
    %c0_6 = arith.constant 0 : index
    %15 = vector.load %arg9[%c0_5, %c0_6] : memref<64x128xf32, #tpu.memory_space<vmem>>, vector<64x128xf32>
    tpu.vector_store %arg9[%c0_5, %c0_6], %14 {strides = array<i32>} : memref<64x128xf32, #tpu.memory_space<vmem>>, vector<64x128xf32>,
    %c0_7 = arith.constant 0 : index
    %c0_8 = arith.constant 0 : index
    %16 = vector.load %arg1[%c0_7, %c0_8] : memref<8x128xf32, #tpu.memory_space<vmem>>, vector<8x128xf32>
    %cst_9 = arith.constant 0.000000e+00 : f32
    %17 = vector.broadcast %cst_9 : f32 to vector<8x32xf32>
    %c0_10 = arith.constant 0 : index
    %c0_11 = arith.constant 0 : index
    %18 = vector.load %arg9[%c0_10, %c0_11] : memref<64x128xf32, #tpu.memory_space<vmem>>, vector<8x128xf32>
    %19 = arith.negf %18 : vector<8x128xf32>
    %20 = math.exp %19 : vector<8x128xf32>
    %cst_12 = arith.constant 1.000000e+00 : f32
    %21 = vector.broadcast %cst_12 : f32 to vector<8x128xf32>
    %22 = arith.addf %21, %20 : vector<8x128xf32>
    %23 = arith.divf %21, %22 : vector<8x128xf32>
    %24 = math.tanh %18 : vector<8x128xf32>
    %25 = vector.extract_strided_slice %23 {offsets = [0, 0], sizes = [8, 32], strides = [1, 1]} : vector<8x128xf32> to vector<8x32xf32>
    %26 = vector.extract_strided_slice %23 {offsets = [0, 32], sizes = [8, 32], strides = [1, 1]} : vector<8x128xf32> to vector<8x32xf32>
    %27 = vector.extract_strided_slice %24 {offsets = [0, 64], sizes = [8, 32], strides = [1, 1]} : vector<8x128xf32> to vector<8x32xf32>
    %28 = vector.extract_strided_slice %23 {offsets = [0, 96], sizes = [8, 32], strides = [1, 1]} : vector<8x128xf32> to vector<8x32xf32>
    %29 = arith.mulf %26, %17 : vector<8x32xf32>
    %30 = arith.mulf %25, %27 : vector<8x32xf32>
    %31 = arith.addf %29, %30 : vector<8x32xf32>
    %32 = math.tanh %31 : vector<8x32xf32>
    %33 = arith.mulf %28, %32 : vector<8x32xf32>
    %34 = vector.extract_strided_slice %16 {offsets = [0, 0], sizes = [8, 16], strides = [1, 1]} : vector<8x128xf32> to vector<8x16xf32>
    %35 = tpu.concatenate %33, %34 in 1 : vector<8x32xf32>, vector<8x16xf32> -> vector<8x48xf32>
    %c0_13 = arith.constant 0 : index
    %c0_14 = arith.constant 0 : index
    %36 = vector.load %arg10[%c0_13, %c0_14] : memref<64x48xf32, #tpu.memory_space<vmem>>, vector<8x48xf32>
    tpu.vector_store %arg10[%c0_13, %c0_14], %35 {strides = array<i32>} : memref<64x48xf32, #tpu.memory_space<vmem>>, vector<8x48xf32>,
    %c8 = arith.constant 8 : index
    %c0_15 = arith.constant 0 : index
    %37 = vector.load %arg9[%c8, %c0_15] : memref<64x128xf32, #tpu.memory_space<vmem>>, vector<8x128xf32>
    %c0_16 = arith.constant 0 : index
    %c0_17 = arith.constant 0 : index
    %38 = vector.load %arg4[%c0_16, %c0_17] : memref<32x128xf32, #tpu.memory_space<vmem>>, vector<32x128xf32>
    %cst_18 = arith.constant dense<0.000000e+00> : vector<8x128xf32>
    %39 = tpu.matmul %33, %38, %cst_18 {dimension_numbers = #tpu.dot_dimension_numbers<[1], [0], [0], [1], [0, 0, 1, 1], [], []>} : vector<8x32xf32>, vector<32x128xf32>, vector<8x128xf32> -> vector<8x128xf32>
    %40 = arith.addf %37, %39 : vector<8x128xf32>
    %41 = arith.negf %40 : vector<8x128xf32>
    %42 = math.exp %41 : vector<8x128xf32>
    %cst_19 = arith.constant 1.000000e+00 : f32
    %43 = vector.broadcast %cst_19 : f32 to vector<8x128xf32>
    %44 = arith.addf %43, %42 : vector<8x128xf32>
    %45 = arith.divf %43, %44 : vector<8x128xf32>
    %46 = math.tanh %40 : vector<8x128xf32>
    %47 = vector.extract_strided_slice %45 {offsets = [0, 0], sizes = [8, 32], strides = [1, 1]} : vector<8x128xf32> to vector<8x32xf32>
    %48 = vector.extract_strided_slice %45 {offsets = [0, 32], sizes = [8, 32], strides = [1, 1]} : vector<8x128xf32> to vector<8x32xf32>
    %49 = vector.extract_strided_slice %46 {offsets = [0, 64], sizes = [8, 32], strides = [1, 1]} : vector<8x128xf32> to vector<8x32xf32>
    %50 = vector.extract_strided_slice %45 {offsets = [0, 96], sizes = [8, 32], strides = [1, 1]} : vector<8x128xf32> to vector<8x32xf32>
    %51 = arith.mulf %48, %31 : vector<8x32xf32>
    %52 = arith.mulf %47, %49 : vector<8x32xf32>
    %53 = arith.addf %51, %52 : vector<8x32xf32>
    %54 = math.tanh %53 : vector<8x32xf32>
    %55 = arith.mulf %50, %54 : vector<8x32xf32>
    %56 = vector.extract_strided_slice %16 {offsets = [0, 16], sizes = [8, 16], strides = [1, 1]} : vector<8x128xf32> to vector<8x16xf32>
    %cst_20 = arith.constant 0.699999988 : f32
    %57 = vector.broadcast %cst_20 : f32 to vector<8x16xf32>
    %58 = arith.mulf %34, %57 : vector<8x16xf32>
    %cst_21 = arith.constant 3.000000e-01 : f32
    %59 = vector.broadcast %cst_21 : f32 to vector<8x16xf32>
    %60 = arith.mulf %56, %59 : vector<8x16xf32>
    %61 = arith.addf %58, %60 : vector<8x16xf32>
    %62 = tpu.concatenate %55, %61 in 1 : vector<8x32xf32>, vector<8x16xf32> -> vector<8x48xf32>
    %c8_22 = arith.constant 8 : index
    %c0_23 = arith.constant 0 : index
    %63 = vector.load %arg10[%c8_22, %c0_23] : memref<64x48xf32, #tpu.memory_space<vmem>>, vector<8x48xf32>
    tpu.vector_store %arg10[%c8_22, %c0_23], %62 {strides = array<i32>} : memref<64x48xf32, #tpu.memory_space<vmem>>, vector<8x48xf32>,
    %c16 = arith.constant 16 : index
    %c0_24 = arith.constant 0 : index
    %64 = vector.load %arg9[%c16, %c0_24] : memref<64x128xf32, #tpu.memory_space<vmem>>, vector<8x128xf32>
    %c0_25 = arith.constant 0 : index
    %c0_26 = arith.constant 0 : index
    %65 = vector.load %arg4[%c0_25, %c0_26] : memref<32x128xf32, #tpu.memory_space<vmem>>, vector<32x128xf32>
    %cst_27 = arith.constant dense<0.000000e+00> : vector<8x128xf32>
    %66 = tpu.matmul %55, %65, %cst_27 {dimension_numbers = #tpu.dot_dimension_numbers<[1], [0], [0], [1], [0, 0, 1, 1], [], []>} : vector<8x32xf32>, vector<32x128xf32>, vector<8x128xf32> -> vector<8x128xf32>
    %67 = arith.addf %64, %66 : vector<8x128xf32>
    %68 = arith.negf %67 : vector<8x128xf32>
    %69 = math.exp %68 : vector<8x128xf32>
    %cst_28 = arith.constant 1.000000e+00 : f32
    %70 = vector.broadcast %cst_28 : f32 to vector<8x128xf32>
    %71 = arith.addf %70, %69 : vector<8x128xf32>
    %72 = arith.divf %70, %71 : vector<8x128xf32>
    %73 = math.tanh %67 : vector<8x128xf32>
    %74 = vector.extract_strided_slice %72 {offsets = [0, 0], sizes = [8, 32], strides = [1, 1]} : vector<8x128xf32> to vector<8x32xf32>
    %75 = vector.extract_strided_slice %72 {offsets = [0, 32], sizes = [8, 32], strides = [1, 1]} : vector<8x128xf32> to vector<8x32xf32>
    %76 = vector.extract_strided_slice %73 {offsets = [0, 64], sizes = [8, 32], strides = [1, 1]} : vector<8x128xf32> to vector<8x32xf32>
    %77 = vector.extract_strided_slice %72 {offsets = [0, 96], sizes = [8, 32], strides = [1, 1]} : vector<8x128xf32> to vector<8x32xf32>
    %78 = arith.mulf %75, %53 : vector<8x32xf32>
    %79 = arith.mulf %74, %76 : vector<8x32xf32>
    %80 = arith.addf %78, %79 : vector<8x32xf32>
    %81 = math.tanh %80 : vector<8x32xf32>
    %82 = arith.mulf %77, %81 : vector<8x32xf32>
    %83 = vector.extract_strided_slice %16 {offsets = [0, 32], sizes = [8, 16], strides = [1, 1]} : vector<8x128xf32> to vector<8x16xf32>
    %cst_29 = arith.constant 0.699999988 : f32
    %84 = vector.broadcast %cst_29 : f32 to vector<8x16xf32>
    %85 = arith.mulf %61, %84 : vector<8x16xf32>
    %cst_30 = arith.constant 3.000000e-01 : f32
    %86 = vector.broadcast %cst_30 : f32 to vector<8x16xf32>
    %87 = arith.mulf %83, %86 : vector<8x16xf32>
    %88 = arith.addf %85, %87 : vector<8x16xf32>
    %89 = tpu.concatenate %82, %88 in 1 : vector<8x32xf32>, vector<8x16xf32> -> vector<8x48xf32>
    %c16_31 = arith.constant 16 : index
    %c0_32 = arith.constant 0 : index
    %90 = vector.load %arg10[%c16_31, %c0_32] : memref<64x48xf32, #tpu.memory_space<vmem>>, vector<8x48xf32>
    tpu.vector_store %arg10[%c16_31, %c0_32], %89 {strides = array<i32>} : memref<64x48xf32, #tpu.memory_space<vmem>>, vector<8x48xf32>,
    %c24 = arith.constant 24 : index
    %c0_33 = arith.constant 0 : index
    %91 = vector.load %arg9[%c24, %c0_33] : memref<64x128xf32, #tpu.memory_space<vmem>>, vector<8x128xf32>
    %c0_34 = arith.constant 0 : index
    %c0_35 = arith.constant 0 : index
    %92 = vector.load %arg4[%c0_34, %c0_35] : memref<32x128xf32, #tpu.memory_space<vmem>>, vector<32x128xf32>
    %cst_36 = arith.constant dense<0.000000e+00> : vector<8x128xf32>
    %93 = tpu.matmul %82, %92, %cst_36 {dimension_numbers = #tpu.dot_dimension_numbers<[1], [0], [0], [1], [0, 0, 1, 1], [], []>} : vector<8x32xf32>, vector<32x128xf32>, vector<8x128xf32> -> vector<8x128xf32>
    %94 = arith.addf %91, %93 : vector<8x128xf32>
    %95 = arith.negf %94 : vector<8x128xf32>
    %96 = math.exp %95 : vector<8x128xf32>
    %cst_37 = arith.constant 1.000000e+00 : f32
    %97 = vector.broadcast %cst_37 : f32 to vector<8x128xf32>
    %98 = arith.addf %97, %96 : vector<8x128xf32>
    %99 = arith.divf %97, %98 : vector<8x128xf32>
    %100 = math.tanh %94 : vector<8x128xf32>
    %101 = vector.extract_strided_slice %99 {offsets = [0, 0], sizes = [8, 32], strides = [1, 1]} : vector<8x128xf32> to vector<8x32xf32>
    %102 = vector.extract_strided_slice %99 {offsets = [0, 32], sizes = [8, 32], strides = [1, 1]} : vector<8x128xf32> to vector<8x32xf32>
    %103 = vector.extract_strided_slice %100 {offsets = [0, 64], sizes = [8, 32], strides = [1, 1]} : vector<8x128xf32> to vector<8x32xf32>
    %104 = vector.extract_strided_slice %99 {offsets = [0, 96], sizes = [8, 32], strides = [1, 1]} : vector<8x128xf32> to vector<8x32xf32>
    %105 = arith.mulf %102, %80 : vector<8x32xf32>
    %106 = arith.mulf %101, %103 : vector<8x32xf32>
    %107 = arith.addf %105, %106 : vector<8x32xf32>
    %108 = math.tanh %107 : vector<8x32xf32>
    %109 = arith.mulf %104, %108 : vector<8x32xf32>
    %110 = vector.extract_strided_slice %16 {offsets = [0, 48], sizes = [8, 16], strides = [1, 1]} : vector<8x128xf32> to vector<8x16xf32>
    %cst_38 = arith.constant 0.699999988 : f32
    %111 = vector.broadcast %cst_38 : f32 to vector<8x16xf32>
    %112 = arith.mulf %88, %111 : vector<8x16xf32>
    %cst_39 = arith.constant 3.000000e-01 : f32
    %113 = vector.broadcast %cst_39 : f32 to vector<8x16xf32>
    %114 = arith.mulf %110, %113 : vector<8x16xf32>
    %115 = arith.addf %112, %114 : vector<8x16xf32>
    %116 = tpu.concatenate %109, %115 in 1 : vector<8x32xf32>, vector<8x16xf32> -> vector<8x48xf32>
    %c24_40 = arith.constant 24 : index
    %c0_41 = arith.constant 0 : index
    %117 = vector.load %arg10[%c24_40, %c0_41] : memref<64x48xf32, #tpu.memory_space<vmem>>, vector<8x48xf32>
    tpu.vector_store %arg10[%c24_40, %c0_41], %116 {strides = array<i32>} : memref<64x48xf32, #tpu.memory_space<vmem>>, vector<8x48xf32>,
    %c32 = arith.constant 32 : index
    %c0_42 = arith.constant 0 : index
    %118 = vector.load %arg9[%c32, %c0_42] : memref<64x128xf32, #tpu.memory_space<vmem>>, vector<8x128xf32>
    %c0_43 = arith.constant 0 : index
    %c0_44 = arith.constant 0 : index
    %119 = vector.load %arg4[%c0_43, %c0_44] : memref<32x128xf32, #tpu.memory_space<vmem>>, vector<32x128xf32>
    %cst_45 = arith.constant dense<0.000000e+00> : vector<8x128xf32>
    %120 = tpu.matmul %109, %119, %cst_45 {dimension_numbers = #tpu.dot_dimension_numbers<[1], [0], [0], [1], [0, 0, 1, 1], [], []>} : vector<8x32xf32>, vector<32x128xf32>, vector<8x128xf32> -> vector<8x128xf32>
    %121 = arith.addf %118, %120 : vector<8x128xf32>
    %122 = arith.negf %121 : vector<8x128xf32>
    %123 = math.exp %122 : vector<8x128xf32>
    %cst_46 = arith.constant 1.000000e+00 : f32
    %124 = vector.broadcast %cst_46 : f32 to vector<8x128xf32>
    %125 = arith.addf %124, %123 : vector<8x128xf32>
    %126 = arith.divf %124, %125 : vector<8x128xf32>
    %127 = math.tanh %121 : vector<8x128xf32>
    %128 = vector.extract_strided_slice %126 {offsets = [0, 0], sizes = [8, 32], strides = [1, 1]} : vector<8x128xf32> to vector<8x32xf32>
    %129 = vector.extract_strided_slice %126 {offsets = [0, 32], sizes = [8, 32], strides = [1, 1]} : vector<8x128xf32> to vector<8x32xf32>
    %130 = vector.extract_strided_slice %127 {offsets = [0, 64], sizes = [8, 32], strides = [1, 1]} : vector<8x128xf32> to vector<8x32xf32>
    %131 = vector.extract_strided_slice %126 {offsets = [0, 96], sizes = [8, 32], strides = [1, 1]} : vector<8x128xf32> to vector<8x32xf32>
    %132 = arith.mulf %129, %107 : vector<8x32xf32>
    %133 = arith.mulf %128, %130 : vector<8x32xf32>
    %134 = arith.addf %132, %133 : vector<8x32xf32>
    %135 = math.tanh %134 : vector<8x32xf32>
    %136 = arith.mulf %131, %135 : vector<8x32xf32>
    %137 = vector.extract_strided_slice %16 {offsets = [0, 64], sizes = [8, 16], strides = [1, 1]} : vector<8x128xf32> to vector<8x16xf32>
    %cst_47 = arith.constant 0.699999988 : f32
    %138 = vector.broadcast %cst_47 : f32 to vector<8x16xf32>
    %139 = arith.mulf %115, %138 : vector<8x16xf32>
    %cst_48 = arith.constant 3.000000e-01 : f32
    %140 = vector.broadcast %cst_48 : f32 to vector<8x16xf32>
    %141 = arith.mulf %137, %140 : vector<8x16xf32>
    %142 = arith.addf %139, %141 : vector<8x16xf32>
    %143 = tpu.concatenate %136, %142 in 1 : vector<8x32xf32>, vector<8x16xf32> -> vector<8x48xf32>
    %c32_49 = arith.constant 32 : index
    %c0_50 = arith.constant 0 : index
    %144 = vector.load %arg10[%c32_49, %c0_50] : memref<64x48xf32, #tpu.memory_space<vmem>>, vector<8x48xf32>
    tpu.vector_store %arg10[%c32_49, %c0_50], %143 {strides = array<i32>} : memref<64x48xf32, #tpu.memory_space<vmem>>, vector<8x48xf32>,
    %c40 = arith.constant 40 : index
    %c0_51 = arith.constant 0 : index
    %145 = vector.load %arg9[%c40, %c0_51] : memref<64x128xf32, #tpu.memory_space<vmem>>, vector<8x128xf32>
    %c0_52 = arith.constant 0 : index
    %c0_53 = arith.constant 0 : index
    %146 = vector.load %arg4[%c0_52, %c0_53] : memref<32x128xf32, #tpu.memory_space<vmem>>, vector<32x128xf32>
    %cst_54 = arith.constant dense<0.000000e+00> : vector<8x128xf32>
    %147 = tpu.matmul %136, %146, %cst_54 {dimension_numbers = #tpu.dot_dimension_numbers<[1], [0], [0], [1], [0, 0, 1, 1], [], []>} : vector<8x32xf32>, vector<32x128xf32>, vector<8x128xf32> -> vector<8x128xf32>
    %148 = arith.addf %145, %147 : vector<8x128xf32>
    %149 = arith.negf %148 : vector<8x128xf32>
    %150 = math.exp %149 : vector<8x128xf32>
    %cst_55 = arith.constant 1.000000e+00 : f32
    %151 = vector.broadcast %cst_55 : f32 to vector<8x128xf32>
    %152 = arith.addf %151, %150 : vector<8x128xf32>
    %153 = arith.divf %151, %152 : vector<8x128xf32>
    %154 = math.tanh %148 : vector<8x128xf32>
    %155 = vector.extract_strided_slice %153 {offsets = [0, 0], sizes = [8, 32], strides = [1, 1]} : vector<8x128xf32> to vector<8x32xf32>
    %156 = vector.extract_strided_slice %153 {offsets = [0, 32], sizes = [8, 32], strides = [1, 1]} : vector<8x128xf32> to vector<8x32xf32>
    %157 = vector.extract_strided_slice %154 {offsets = [0, 64], sizes = [8, 32], strides = [1, 1]} : vector<8x128xf32> to vector<8x32xf32>
    %158 = vector.extract_strided_slice %153 {offsets = [0, 96], sizes = [8, 32], strides = [1, 1]} : vector<8x128xf32> to vector<8x32xf32>
    %159 = arith.mulf %156, %134 : vector<8x32xf32>
    %160 = arith.mulf %155, %157 : vector<8x32xf32>
    %161 = arith.addf %159, %160 : vector<8x32xf32>
    %162 = math.tanh %161 : vector<8x32xf32>
    %163 = arith.mulf %158, %162 : vector<8x32xf32>
    %164 = vector.extract_strided_slice %16 {offsets = [0, 80], sizes = [8, 16], strides = [1, 1]} : vector<8x128xf32> to vector<8x16xf32>
    %cst_56 = arith.constant 0.699999988 : f32
    %165 = vector.broadcast %cst_56 : f32 to vector<8x16xf32>
    %166 = arith.mulf %142, %165 : vector<8x16xf32>
    %cst_57 = arith.constant 3.000000e-01 : f32
    %167 = vector.broadcast %cst_57 : f32 to vector<8x16xf32>
    %168 = arith.mulf %164, %167 : vector<8x16xf32>
    %169 = arith.addf %166, %168 : vector<8x16xf32>
    %170 = tpu.concatenate %163, %169 in 1 : vector<8x32xf32>, vector<8x16xf32> -> vector<8x48xf32>
    %c40_58 = arith.constant 40 : index
    %c0_59 = arith.constant 0 : index
    %171 = vector.load %arg10[%c40_58, %c0_59] : memref<64x48xf32, #tpu.memory_space<vmem>>, vector<8x48xf32>
    tpu.vector_store %arg10[%c40_58, %c0_59], %170 {strides = array<i32>} : memref<64x48xf32, #tpu.memory_space<vmem>>, vector<8x48xf32>,
    %c48 = arith.constant 48 : index
    %c0_60 = arith.constant 0 : index
    %172 = vector.load %arg9[%c48, %c0_60] : memref<64x128xf32, #tpu.memory_space<vmem>>, vector<8x128xf32>
    %c0_61 = arith.constant 0 : index
    %c0_62 = arith.constant 0 : index
    %173 = vector.load %arg4[%c0_61, %c0_62] : memref<32x128xf32, #tpu.memory_space<vmem>>, vector<32x128xf32>
    %cst_63 = arith.constant dense<0.000000e+00> : vector<8x128xf32>
    %174 = tpu.matmul %163, %173, %cst_63 {dimension_numbers = #tpu.dot_dimension_numbers<[1], [0], [0], [1], [0, 0, 1, 1], [], []>} : vector<8x32xf32>, vector<32x128xf32>, vector<8x128xf32> -> vector<8x128xf32>
    %175 = arith.addf %172, %174 : vector<8x128xf32>
    %176 = arith.negf %175 : vector<8x128xf32>
    %177 = math.exp %176 : vector<8x128xf32>
    %cst_64 = arith.constant 1.000000e+00 : f32
    %178 = vector.broadcast %cst_64 : f32 to vector<8x128xf32>
    %179 = arith.addf %178, %177 : vector<8x128xf32>
    %180 = arith.divf %178, %179 : vector<8x128xf32>
    %181 = math.tanh %175 : vector<8x128xf32>
    %182 = vector.extract_strided_slice %180 {offsets = [0, 0], sizes = [8, 32], strides = [1, 1]} : vector<8x128xf32> to vector<8x32xf32>
    %183 = vector.extract_strided_slice %180 {offsets = [0, 32], sizes = [8, 32], strides = [1, 1]} : vector<8x128xf32> to vector<8x32xf32>
    %184 = vector.extract_strided_slice %181 {offsets = [0, 64], sizes = [8, 32], strides = [1, 1]} : vector<8x128xf32> to vector<8x32xf32>
    %185 = vector.extract_strided_slice %180 {offsets = [0, 96], sizes = [8, 32], strides = [1, 1]} : vector<8x128xf32> to vector<8x32xf32>
    %186 = arith.mulf %183, %161 : vector<8x32xf32>
    %187 = arith.mulf %182, %184 : vector<8x32xf32>
    %188 = arith.addf %186, %187 : vector<8x32xf32>
    %189 = math.tanh %188 : vector<8x32xf32>
    %190 = arith.mulf %185, %189 : vector<8x32xf32>
    %191 = vector.extract_strided_slice %16 {offsets = [0, 96], sizes = [8, 16], strides = [1, 1]} : vector<8x128xf32> to vector<8x16xf32>
    %cst_65 = arith.constant 0.699999988 : f32
    %192 = vector.broadcast %cst_65 : f32 to vector<8x16xf32>
    %193 = arith.mulf %169, %192 : vector<8x16xf32>
    %cst_66 = arith.constant 3.000000e-01 : f32
    %194 = vector.broadcast %cst_66 : f32 to vector<8x16xf32>
    %195 = arith.mulf %191, %194 : vector<8x16xf32>
    %196 = arith.addf %193, %195 : vector<8x16xf32>
    %197 = tpu.concatenate %190, %196 in 1 : vector<8x32xf32>, vector<8x16xf32> -> vector<8x48xf32>
    %c48_67 = arith.constant 48 : index
    %c0_68 = arith.constant 0 : index
    %198 = vector.load %arg10[%c48_67, %c0_68] : memref<64x48xf32, #tpu.memory_space<vmem>>, vector<8x48xf32>
    tpu.vector_store %arg10[%c48_67, %c0_68], %197 {strides = array<i32>} : memref<64x48xf32, #tpu.memory_space<vmem>>, vector<8x48xf32>,
    %c56 = arith.constant 56 : index
    %c0_69 = arith.constant 0 : index
    %199 = vector.load %arg9[%c56, %c0_69] : memref<64x128xf32, #tpu.memory_space<vmem>>, vector<8x128xf32>
    %c0_70 = arith.constant 0 : index
    %c0_71 = arith.constant 0 : index
    %200 = vector.load %arg4[%c0_70, %c0_71] : memref<32x128xf32, #tpu.memory_space<vmem>>, vector<32x128xf32>
    %cst_72 = arith.constant dense<0.000000e+00> : vector<8x128xf32>
    %201 = tpu.matmul %190, %200, %cst_72 {dimension_numbers = #tpu.dot_dimension_numbers<[1], [0], [0], [1], [0, 0, 1, 1], [], []>} : vector<8x32xf32>, vector<32x128xf32>, vector<8x128xf32> -> vector<8x128xf32>
    %202 = arith.addf %199, %201 : vector<8x128xf32>
    %203 = arith.negf %202 : vector<8x128xf32>
    %204 = math.exp %203 : vector<8x128xf32>
    %cst_73 = arith.constant 1.000000e+00 : f32
    %205 = vector.broadcast %cst_73 : f32 to vector<8x128xf32>
    %206 = arith.addf %205, %204 : vector<8x128xf32>
    %207 = arith.divf %205, %206 : vector<8x128xf32>
    %208 = math.tanh %202 : vector<8x128xf32>
    %209 = vector.extract_strided_slice %207 {offsets = [0, 0], sizes = [8, 32], strides = [1, 1]} : vector<8x128xf32> to vector<8x32xf32>
    %210 = vector.extract_strided_slice %207 {offsets = [0, 32], sizes = [8, 32], strides = [1, 1]} : vector<8x128xf32> to vector<8x32xf32>
    %211 = vector.extract_strided_slice %208 {offsets = [0, 64], sizes = [8, 32], strides = [1, 1]} : vector<8x128xf32> to vector<8x32xf32>
    %212 = vector.extract_strided_slice %207 {offsets = [0, 96], sizes = [8, 32], strides = [1, 1]} : vector<8x128xf32> to vector<8x32xf32>
    %213 = arith.mulf %210, %188 : vector<8x32xf32>
    %214 = arith.mulf %209, %211 : vector<8x32xf32>
    %215 = arith.addf %213, %214 : vector<8x32xf32>
    %216 = math.tanh %215 : vector<8x32xf32>
    %217 = arith.mulf %212, %216 : vector<8x32xf32>
    %218 = vector.extract_strided_slice %16 {offsets = [0, 112], sizes = [8, 16], strides = [1, 1]} : vector<8x128xf32> to vector<8x16xf32>
    %cst_74 = arith.constant 0.699999988 : f32
    %219 = vector.broadcast %cst_74 : f32 to vector<8x16xf32>
    %220 = arith.mulf %196, %219 : vector<8x16xf32>
    %cst_75 = arith.constant 3.000000e-01 : f32
    %221 = vector.broadcast %cst_75 : f32 to vector<8x16xf32>
    %222 = arith.mulf %218, %221 : vector<8x16xf32>
    %223 = arith.addf %220, %222 : vector<8x16xf32>
    %224 = tpu.concatenate %217, %223 in 1 : vector<8x32xf32>, vector<8x16xf32> -> vector<8x48xf32>
    %c56_76 = arith.constant 56 : index
    %c0_77 = arith.constant 0 : index
    %225 = vector.load %arg10[%c56_76, %c0_77] : memref<64x48xf32, #tpu.memory_space<vmem>>, vector<8x48xf32>
    tpu.vector_store %arg10[%c56_76, %c0_77], %224 {strides = array<i32>} : memref<64x48xf32, #tpu.memory_space<vmem>>, vector<8x48xf32>,
    %c0_78 = arith.constant 0 : index
    %c0_79 = arith.constant 0 : index
    %226 = vector.load %arg10[%c0_78, %c0_79] : memref<64x48xf32, #tpu.memory_space<vmem>>, vector<64x48xf32>
    %c0_80 = arith.constant 0 : index
    %c0_81 = arith.constant 0 : index
    %227 = vector.load %arg6[%c0_80, %c0_81] : memref<48x32xf32, #tpu.memory_space<vmem>>, vector<48x32xf32>
    %cst_82 = arith.constant dense<0.000000e+00> : vector<64x32xf32>
    %228 = tpu.matmul %226, %227, %cst_82 {dimension_numbers = #tpu.dot_dimension_numbers<[1], [0], [0], [1], [0, 0, 1, 1], [], []>} : vector<64x48xf32>, vector<48x32xf32>, vector<64x32xf32> -> vector<64x32xf32>
    %c0_83 = arith.constant 0 : index
    %c0_84 = arith.constant 0 : index
    %229 = vector.load %arg2[%c0_83, %c0_84] : memref<8x1xi32, #tpu.memory_space<vmem>>, vector<8x1xi32>
    %c0_85 = arith.constant 0 : index
    %c0_86 = arith.constant 0 : index
    %230 = vector.load %arg7[%c0_85, %c0_86] : memref<1x32xf32, #tpu.memory_space<vmem>>, vector<1x32xf32>
    %c0_i32 = arith.constant 0 : i32
    %231 = vector.broadcast %c0_i32 : i32 to vector<8x1xi32>
    %232 = arith.cmpi sgt, %229, %231 : vector<8x1xi32>
    %233 = vector.extract_strided_slice %228 {offsets = [0, 0], sizes = [8, 32], strides = [1, 1]} : vector<64x32xf32> to vector<8x32xf32>
    %cst_87 = arith.constant 0.000000e+00 : f32
    %234 = vector.shape_cast %232 : vector<8x1xi1> to vector<8x1xi1>
    %235 = vector.broadcast %234 : vector<8x1xi1> to vector<8x32xi1>
    %236 = vector.broadcast %cst_87 : f32 to vector<8x32xf32>
    %237 = arith.select %235, %233, %236 : vector<8x32xi1>, vector<8x32xf32>
    %238 = vector.broadcast %230 : vector<1x32xf32> to vector<8x32xf32>
    %239 = arith.addf %237, %238 : vector<8x32xf32>
    %c1_i32 = arith.constant 1 : i32
    %240 = vector.broadcast %c1_i32 : i32 to vector<8x1xi32>
    %241 = arith.cmpi sgt, %229, %240 : vector<8x1xi32>
    %242 = vector.extract_strided_slice %228 {offsets = [8, 0], sizes = [8, 32], strides = [1, 1]} : vector<64x32xf32> to vector<8x32xf32>
    %cst_88 = arith.constant 0.000000e+00 : f32
    %243 = vector.shape_cast %241 : vector<8x1xi1> to vector<8x1xi1>
    %244 = vector.broadcast %243 : vector<8x1xi1> to vector<8x32xi1>
    %245 = vector.broadcast %cst_88 : f32 to vector<8x32xf32>
    %246 = arith.select %244, %242, %245 : vector<8x32xi1>, vector<8x32xf32>
    %247 = vector.broadcast %230 : vector<1x32xf32> to vector<8x32xf32>
    %248 = arith.addf %246, %247 : vector<8x32xf32>
    %c2_i32 = arith.constant 2 : i32
    %249 = vector.broadcast %c2_i32 : i32 to vector<8x1xi32>
    %250 = arith.cmpi sgt, %229, %249 : vector<8x1xi32>
    %251 = vector.extract_strided_slice %228 {offsets = [16, 0], sizes = [8, 32], strides = [1, 1]} : vector<64x32xf32> to vector<8x32xf32>
    %cst_89 = arith.constant 0.000000e+00 : f32
    %252 = vector.shape_cast %250 : vector<8x1xi1> to vector<8x1xi1>
    %253 = vector.broadcast %252 : vector<8x1xi1> to vector<8x32xi1>
    %254 = vector.broadcast %cst_89 : f32 to vector<8x32xf32>
    %255 = arith.select %253, %251, %254 : vector<8x32xi1>, vector<8x32xf32>
    %256 = vector.broadcast %230 : vector<1x32xf32> to vector<8x32xf32>
    %257 = arith.addf %255, %256 : vector<8x32xf32>
    %c3_i32 = arith.constant 3 : i32
    %258 = vector.broadcast %c3_i32 : i32 to vector<8x1xi32>
    %259 = arith.cmpi sgt, %229, %258 : vector<8x1xi32>
    %260 = vector.extract_strided_slice %228 {offsets = [24, 0], sizes = [8, 32], strides = [1, 1]} : vector<64x32xf32> to vector<8x32xf32>
    %cst_90 = arith.constant 0.000000e+00 : f32
    %261 = vector.shape_cast %259 : vector<8x1xi1> to vector<8x1xi1>
    %262 = vector.broadcast %261 : vector<8x1xi1> to vector<8x32xi1>
    %263 = vector.broadcast %cst_90 : f32 to vector<8x32xf32>
    %264 = arith.select %262, %260, %263 : vector<8x32xi1>, vector<8x32xf32>
    %265 = vector.broadcast %230 : vector<1x32xf32> to vector<8x32xf32>
    %266 = arith.addf %264, %265 : vector<8x32xf32>
    %c4_i32 = arith.constant 4 : i32
    %267 = vector.broadcast %c4_i32 : i32 to vector<8x1xi32>
    %268 = arith.cmpi sgt, %229, %267 : vector<8x1xi32>
    %269 = vector.extract_strided_slice %228 {offsets = [32, 0], sizes = [8, 32], strides = [1, 1]} : vector<64x32xf32> to vector<8x32xf32>
    %cst_91 = arith.constant 0.000000e+00 : f32
    %270 = vector.shape_cast %268 : vector<8x1xi1> to vector<8x1xi1>
    %271 = vector.broadcast %270 : vector<8x1xi1> to vector<8x32xi1>
    %272 = vector.broadcast %cst_91 : f32 to vector<8x32xf32>
    %273 = arith.select %271, %269, %272 : vector<8x32xi1>, vector<8x32xf32>
    %274 = vector.broadcast %230 : vector<1x32xf32> to vector<8x32xf32>
    %275 = arith.addf %273, %274 : vector<8x32xf32>
    %c5_i32 = arith.constant 5 : i32
    %276 = vector.broadcast %c5_i32 : i32 to vector<8x1xi32>
    %277 = arith.cmpi sgt, %229, %276 : vector<8x1xi32>
    %278 = vector.extract_strided_slice %228 {offsets = [40, 0], sizes = [8, 32], strides = [1, 1]} : vector<64x32xf32> to vector<8x32xf32>
    %cst_92 = arith.constant 0.000000e+00 : f32
    %279 = vector.shape_cast %277 : vector<8x1xi1> to vector<8x1xi1>
    %280 = vector.broadcast %279 : vector<8x1xi1> to vector<8x32xi1>
    %281 = vector.broadcast %cst_92 : f32 to vector<8x32xf32>
    %282 = arith.select %280, %278, %281 : vector<8x32xi1>, vector<8x32xf32>
    %283 = vector.broadcast %230 : vector<1x32xf32> to vector<8x32xf32>
    %284 = arith.addf %282, %283 : vector<8x32xf32>
    %c6_i32 = arith.constant 6 : i32
    %285 = vector.broadcast %c6_i32 : i32 to vector<8x1xi32>
    %286 = arith.cmpi sgt, %229, %285 : vector<8x1xi32>
    %287 = vector.extract_strided_slice %228 {offsets = [48, 0], sizes = [8, 32], strides = [1, 1]} : vector<64x32xf32> to vector<8x32xf32>
    %cst_93 = arith.constant 0.000000e+00 : f32
    %288 = vector.shape_cast %286 : vector<8x1xi1> to vector<8x1xi1>
    %289 = vector.broadcast %288 : vector<8x1xi1> to vector<8x32xi1>
    %290 = vector.broadcast %cst_93 : f32 to vector<8x32xf32>
    %291 = arith.select %289, %287, %290 : vector<8x32xi1>, vector<8x32xf32>
    %292 = vector.broadcast %230 : vector<1x32xf32> to vector<8x32xf32>
    %293 = arith.addf %291, %292 : vector<8x32xf32>
    %c7_i32 = arith.constant 7 : i32
    %294 = vector.broadcast %c7_i32 : i32 to vector<8x1xi32>
    %295 = arith.cmpi sgt, %229, %294 : vector<8x1xi32>
    %296 = vector.extract_strided_slice %228 {offsets = [56, 0], sizes = [8, 32], strides = [1, 1]} : vector<64x32xf32> to vector<8x32xf32>
    %cst_94 = arith.constant 0.000000e+00 : f32
    %297 = vector.shape_cast %295 : vector<8x1xi1> to vector<8x1xi1>
    %298 = vector.broadcast %297 : vector<8x1xi1> to vector<8x32xi1>
    %299 = vector.broadcast %cst_94 : f32 to vector<8x32xf32>
    %300 = arith.select %298, %296, %299 : vector<8x32xi1>, vector<8x32xf32>
    %301 = vector.broadcast %230 : vector<1x32xf32> to vector<8x32xf32>
    %302 = arith.addf %300, %301 : vector<8x32xf32>
    %303 = tpu.concatenate %239, %248, %257, %266, %275, %284, %293, %302 in 1 : vector<8x32xf32>, vector<8x32xf32>, vector<8x32xf32>, vector<8x32xf32>, vector<8x32xf32>, vector<8x32xf32>, vector<8x32xf32>, vector<8x32xf32> -> vector<8x256xf32>
    %c0_95 = arith.constant 0 : index
    %c0_96 = arith.constant 0 : index
    %304 = vector.load %arg8[%c0_95, %c0_96] : memref<8x256xf32, #tpu.memory_space<vmem>>, vector<8x256xf32>
    tpu.vector_store %arg8[%c0_95, %c0_96], %303 {strides = array<i32>} : memref<8x256xf32, #tpu.memory_space<vmem>>, vector<8x256xf32>,
    return
  }
}

</mosaic_0001>

<llo_original>
// kernel: naver_forward.1
$region0: #{naver_forward.1}
  #allocation0 [shape = 'u32[]', space=smem, size = 0x4, offset = 0x4, fixed_abs, tag = 'smem constant byte address 0x4 - core index']
  #allocation1 [shape = 'u32[72,128]{1,0:T(1,128)}', space=vmem, size = 0x9000, scoped, tag = 'internal scratch']
  #allocation2 [shape = 'f32[64,128]{1,0:T(8,128)}', space=vmem, size = 0x8000, scoped, tag = 'scratch operand']
  #allocation3 [shape = 'f32[64,48]{1,0:T(8,128)}', space=vmem, size = 0x8000, scoped, tag = 'scratch operand']
  %s0 = inlined_call_operand.vmem [shape: f32[8,256], index: 0, kind: input, shape index: {}]
  %s1 = inlined_call_operand.vmem [shape: f32[8,128], index: 1, kind: input, shape index: {}]
  %s2 = inlined_call_operand.vmem [shape: s32[8,1], index: 2, kind: input, shape index: {}]
  %s3 = inlined_call_operand.vmem [shape: f32[32,128], index: 3, kind: input, shape index: {}]
  %s4 = inlined_call_operand.vmem [shape: f32[32,128], index: 4, kind: input, shape index: {}]
  %s5 = inlined_call_operand.vmem [shape: f32[1,128], index: 5, kind: input, shape index: {}]
  %s6 = inlined_call_operand.vmem [shape: f32[48,32], index: 6, kind: input, shape index: {}]
  %s7 = inlined_call_operand.vmem [shape: f32[1,32], index: 7, kind: input, shape index: {}]
  %s8 = inlined_call_operand.vmem [shape: f32[8,256], index: 8, kind: output, shape index: {}]
  %s9 = sld [smem:[#allocation0]]
  $region42: #{naver_forward.1} parent=0
    _
  %s11 = ssub.s32 1, %s9
  %s12 = scalar_select 0, %s11, %s9
  // Predicated region
  $region2: #{naver_forward.1} parent=0 // pred_check
    _
  $region3: #{naver_forward.1} parent=0 // pred_check_branch
    %14 = sbr.rel (0) target = $region5
  $region4: #{naver_forward.1} parent=0 // pred_region
    _
  $region5: #{naver_forward.1} parent=0 // pred_fallthru
    _
  // Predicated region
  $region6: #{naver_forward.1} parent=0 // pred_check
    _
  $region7: #{naver_forward.1} parent=0 // pred_check_branch
    %16 = sbr.rel (0) target = $region9
  $region8: #{naver_forward.1} parent=0 // pred_region
    _
  $region9: #{naver_forward.1} parent=0 // pred_fallthru
    _
  // Predicated region
  $region10: #{naver_forward.1} parent=0 // pred_check
    _
  $region11: #{naver_forward.1} parent=0 // pred_check_branch
    %18 = sbr.rel (0) target = $region13
  $region12: #{naver_forward.1} parent=0 // pred_region
    _
  $region13: #{naver_forward.1} parent=0 // pred_fallthru
    _
  // Predicated region
  $region14: #{naver_forward.1} parent=0 // pred_check
    _
  $region15: #{naver_forward.1} parent=0 // pred_check_branch
    %20 = sbr.rel (0) target = $region17
  $region16: #{naver_forward.1} parent=0 // pred_region
    _
  $region17: #{naver_forward.1} parent=0 // pred_fallthru
    _
  // Predicated region
  $region18: #{naver_forward.1} parent=0 // pred_check
    _
  $region19: #{naver_forward.1} parent=0 // pred_check_branch
    %22 = sbr.rel (0) target = $region21
  $region20: #{naver_forward.1} parent=0 // pred_region
    _
  $region21: #{naver_forward.1} parent=0 // pred_fallthru
    _
  // Predicated region
  $region22: #{naver_forward.1} parent=0 // pred_check
    _
  $region23: #{naver_forward.1} parent=0 // pred_check_branch
    %24 = sbr.rel (0) target = $region25
  $region24: #{naver_forward.1} parent=0 // pred_region
    _
  $region25: #{naver_forward.1} parent=0 // pred_fallthru
    _
  // Predicated region
  $region26: #{naver_forward.1} parent=0 // pred_check
    _
  $region27: #{naver_forward.1} parent=0 // pred_check_branch
    %26 = sbr.rel (0) target = $region29
  $region28: #{naver_forward.1} parent=0 // pred_region
    _
  $region29: #{naver_forward.1} parent=0 // pred_fallthru
    _
  // Predicated region
  $region30: #{naver_forward.1} parent=0 // pred_check
    _
  $region31: #{naver_forward.1} parent=0 // pred_check_branch
    %28 = sbr.rel (0) target = $region33
  $region32: #{naver_forward.1} parent=0 // pred_region
    _
  $region33: #{naver_forward.1} parent=0 // pred_fallthru
    _
  %v29 = vld [vmem:[%s0] sm:$0xff]
  %v30 = vld [vmem:[%s0 + $0x8] sm:$0xff]
  %32 = vrot.lane.b32.xlu0 %v29, 96
  %v33 = vpop.permute.xlu0 %32
  %34 = vrot.lane.b32.xlu0 %v29, 64
  %v35 = vpop.permute.xlu0 %34
  %36 = vrot.lane.b32.xlu0 %v29, 32
  %v37 = vpop.permute.xlu0 %36
  %39 = vrot.lane.b32.xlu0 %v30, 96
  %v40 = vpop.permute.xlu0 %39
  %41 = vrot.lane.b32.xlu0 %v30, 64
  %v42 = vpop.permute.xlu0 %41
  %43 = vrot.lane.b32.xlu0 %v30, 32
  %v44 = vpop.permute.xlu0 %43
  %v45 = vld [vmem:[%s3] sm:$0xff]
  %v46 = vld [vmem:[%s3 + $0x8] sm:$0xff]
  %v47 = vld [vmem:[%s3 + $0x10] sm:$0xff]
  %v48 = vld [vmem:[%s3 + $0x18] sm:$0xff]
  %v49 = vld [vmem:[%s5] sm:$0x1]
  %v51 = vperm.slane %v49, 0
  %vm53 = vcmask 261120
  %v54 = vsel %vm53, %v29, 0
  %v56 = vsel %vm53, %v33, 0
  %v58 = vsel %vm53, %v35, 0
  %v60 = vsel %vm53, %v37, 0
  %v62 = vsel %vm53, %v30, 0
  %v64 = vsel %vm53, %v40, 0
  %v66 = vsel %vm53, %v42, 0
  %v68 = vsel %vm53, %v44, 0
  %70 = vmatpush.msra.mxu0 0.0
  %71 = vmatpush.msra.mxu0 0.0
  %72 = vmatpush.msra.mxu0 0.0
  %73 = vmatpush.msra.mxu0 0.0
  %74 = vmatpush.msra.mxu0 0.0
  %75 = vmatpush.msra.mxu0 0.0
  %76 = vmatpush.msra.mxu0 0.0
  %77 = vmatpush.msra.mxu0 0.0
  %78 = vmatpush.msra.mxu0 0.0
  %79 = vmatpush.msra.mxu0 0.0
  %80 = vmatpush.msra.mxu0 0.0
  %81 = vmatpush.msra.mxu0 0.0
  %82 = vmatpush.msra.mxu0 %v48
  %83 = vmatpush.msra.mxu0 %v47
  %84 = vmatpush.msra.mxu0 %v46
  %85 = vmatpush.msra.mxu0 %v45
  %86 = vmatmul.f32.gmra.mxu0 %v54
  %v87 = vpop.f32.mrf.mxu0
  %v88 = vadd.f32 %v51, %v87
  %89 = vmatmul.f32.gmra.mxu0 %v56
  %v90 = vpop.f32.mrf.mxu0
  %v91 = vadd.f32 %v51, %v90
  %92 = vmatmul.f32.gmra.mxu0 %v58
  %v93 = vpop.f32.mrf.mxu0
  %v94 = vadd.f32 %v51, %v93
  %95 = vmatmul.f32.gmra.mxu0 %v60
  %v96 = vpop.f32.mrf.mxu0
  %v97 = vadd.f32 %v51, %v96
  %98 = vmatmul.f32.gmra.mxu0 %v62
  %v99 = vpop.f32.mrf.mxu0
  %v100 = vadd.f32 %v51, %v99
  %101 = vmatmul.f32.gmra.mxu0 %v64
  %v102 = vpop.f32.mrf.mxu0
  %v103 = vadd.f32 %v51, %v102
  %104 = vmatmul.f32.gmra.mxu0 %v66
  %v105 = vpop.f32.mrf.mxu0
  %v106 = vadd.f32 %v51, %v105
  %107 = vmatmul.f32.gmra.mxu0 %v68
  %v108 = vpop.f32.mrf.mxu0
  %v109 = vadd.f32 %v51, %v108
  %110 = vdwg.mxu0
  %111 = vst [vmem:[#allocation2] sm:$0xff] %v88
  %112 = vst [vmem:[#allocation2 + $0x8] sm:$0xff] %v91
  %113 = vst [vmem:[#allocation2 + $0x10] sm:$0xff] %v94
  %114 = vst [vmem:[#allocation2 + $0x18] sm:$0xff] %v97
  %115 = vst [vmem:[#allocation2 + $0x20] sm:$0xff] %v100
  %116 = vst [vmem:[#allocation2 + $0x28] sm:$0xff] %v103
  %117 = vst [vmem:[#allocation2 + $0x30] sm:$0xff] %v106
  %118 = vst [vmem:[#allocation2 + $0x38] sm:$0xff] %v109
  %v119 = vld [vmem:[%s1] sm:$0xff]
  %v120 = vld [vmem:[#allocation2] sm:$0xff]
  %v121 = vxor.u32 %v120, 2147483648
  %v122 = vmul.f32 %v121, 1.442695
  %v123 = vpow.pop %v122
  %v124 = vadd.f32 %v123, 1.0
  %v125 = vrcp.pop %v124
  %v126 = vmul.f32 %v124, %v125
  %v127 = vsub.f32 1.0, %v126
  %v128 = vmul.f32 %v125, %v127
  %v129 = vadd.f32 %v125, %v128
  %vm130 = vweird.f32 %v124
  %vm131 = vweird.f32 %v125
  %vm132 = vmor %vm130, %vm131
  %v133 = vsel %vm132, %v125, %v129
  %v134 = vand.u32 2147483647, %v124
  %vm135 = vcmp.eq.f32.partialorder %v134, 8.507059e+37
  %v136 = vand.u32 %v124, 2147483648
  %v137 = vor.u32 1.1754944e-38, %v136
  %v138 = vsel %vm135, %v137, %v133
  %v139 = vmul.f32 1.0, %v138
  %v140 = vtanh.pop %v120
  %v141 = vmul.f32 %v139, 0.0
  %143 = vrot.lane.b32.xlu0 %v140, 64
  %v144 = vpop.permute.xlu0 %143
  %v146 = vmul.f32 %v139, %v144
  %148 = vrot.lane.b32.xlu0 %v146, 32
  %v149 = vpop.permute.xlu0 %148
  %v151 = vadd.f32 %v141, %v149
  %v152 = vtanh.pop %v151
  %154 = vrot.lane.b32.xlu0 %v152, 64
  %v155 = vpop.permute.xlu0 %154
  %v157 = vmul.f32 %v139, %v155
  %159 = vrot.lane.b32.xlu0 %v157, 32
  %v160 = vpop.permute.xlu0 %159
  %163 = vrot.lane.b32.xlu0 %v119, 32
  %v164 = vpop.permute.xlu0 %163
  %v166 = vsel %vm53, %v160, %v164
  %vm167 = vcmask 392192
  %168 = vst.msk [vmem:[#allocation3] sm:$0xff] %vm167, %v166
  %v169 = vld [vmem:[#allocation2 + $0x8] sm:$0xff]
  %v170 = vld [vmem:[%s4] sm:$0xff]
  %v171 = vld [vmem:[%s4 + $0x8] sm:$0xff]
  %v172 = vld [vmem:[%s4 + $0x10] sm:$0xff]
  %v173 = vld [vmem:[%s4 + $0x18] sm:$0xff]
  %v174 = vsel %vm53, %v160, 0
  %176 = vmatpush.msra.mxu0 0.0
  %177 = vmatpush.msra.mxu0 0.0
  %178 = vmatpush.msra.mxu0 0.0
  %179 = vmatpush.msra.mxu0 0.0
  %180 = vmatpush.msra.mxu0 0.0
  %181 = vmatpush.msra.mxu0 0.0
  %182 = vmatpush.msra.mxu0 0.0
  %183 = vmatpush.msra.mxu0 0.0
  %184 = vmatpush.msra.mxu0 0.0
  %185 = vmatpush.msra.mxu0 0.0
  %186 = vmatpush.msra.mxu0 0.0
  %187 = vmatpush.msra.mxu0 0.0
  %188 = vmatpush.msra.mxu0 %v173
  %189 = vmatpush.msra.mxu0 %v172
  %190 = vmatpush.msra.mxu0 %v171
  %191 = vmatpush.msra.mxu0 %v170
  %192 = vmatmul.f32.gmra.mxu0 %v174
  %v193 = vpop.f32.mrf.mxu0
  %v194 = vadd.f32 0.0, %v193
  %195 = vdwg.mxu0
  %v196 = vadd.f32 %v169, %v194
  %v197 = vxor.u32 %v196, 2147483648
  %v198 = vmul.f32 %v197, 1.442695
  %v199 = vpow.pop %v198
  %v200 = vadd.f32 %v199, 1.0
  %v201 = vrcp.pop %v200
  %v202 = vmul.f32 %v200, %v201
  %v203 = vsub.f32 1.0, %v202
  %v204 = vmul.f32 %v201, %v203
  %v205 = vadd.f32 %v201, %v204
  %vm206 = vweird.f32 %v200
  %vm207 = vweird.f32 %v201
  %vm208 = vmor %vm206, %vm207
  %v209 = vsel %vm208, %v201, %v205
  %v210 = vand.u32 2147483647, %v200
  %vm211 = vcmp.eq.f32.partialorder %v210, 8.507059e+37
  %v212 = vand.u32 %v200, 2147483648
  %v213 = vor.u32 1.1754944e-38, %v212
  %v214 = vsel %vm211, %v213, %v209
  %v215 = vmul.f32 1.0, %v214
  %v216 = vtanh.pop %v196
  %v217 = vmul.f32 %v215, %v151
  %219 = vrot.lane.b32.xlu0 %v216, 64
  %v220 = vpop.permute.xlu0 %219
  %v222 = vmul.f32 %v215, %v220
  %224 = vrot.lane.b32.xlu0 %v222, 32
  %v225 = vpop.permute.xlu0 %224
  %v227 = vadd.f32 %v217, %v225
  %v228 = vtanh.pop %v227
  %230 = vrot.lane.b32.xlu0 %v228, 64
  %v231 = vpop.permute.xlu0 %230
  %v233 = vmul.f32 %v215, %v231
  %v234 = vmul.f32 %v119, 0.7
  %v235 = vmul.f32 %v119, 0.3
  %237 = vrot.lane.b32.xlu0 %v235, 112
  %v238 = vpop.permute.xlu0 %237
  %v240 = vadd.f32 %v234, %v238
  %242 = vrot.lane.b32.xlu0 %v233, 32
  %v243 = vpop.permute.xlu0 %242
  %246 = vrot.lane.b32.xlu0 %v240, 32
  %v247 = vpop.permute.xlu0 %246
  %v249 = vsel %vm53, %v243, %v247
  %250 = vst.msk [vmem:[#allocation3 + $0x8] sm:$0xff] %vm167, %v249
  %v251 = vld [vmem:[#allocation2 + $0x10] sm:$0xff]
  %v252 = vld [vmem:[%s4] sm:$0xff]
  %v253 = vld [vmem:[%s4 + $0x8] sm:$0xff]
  %v254 = vld [vmem:[%s4 + $0x10] sm:$0xff]
  %v255 = vld [vmem:[%s4 + $0x18] sm:$0xff]
  %v256 = vsel %vm53, %v243, 0
  %258 = vmatpush.msra.mxu0 0.0
  %259 = vmatpush.msra.mxu0 0.0
  %260 = vmatpush.msra.mxu0 0.0
  %261 = vmatpush.msra.mxu0 0.0
  %262 = vmatpush.msra.mxu0 0.0
  %263 = vmatpush.msra.mxu0 0.0
  %264 = vmatpush.msra.mxu0 0.0
  %265 = vmatpush.msra.mxu0 0.0
  %266 = vmatpush.msra.mxu0 0.0
  %267 = vmatpush.msra.mxu0 0.0
  %268 = vmatpush.msra.mxu0 0.0
  %269 = vmatpush.msra.mxu0 0.0
  %270 = vmatpush.msra.mxu0 %v255
  %271 = vmatpush.msra.mxu0 %v254
  %272 = vmatpush.msra.mxu0 %v253
  %273 = vmatpush.msra.mxu0 %v252
  %274 = vmatmul.f32.gmra.mxu0 %v256
  %v275 = vpop.f32.mrf.mxu0
  %v276 = vadd.f32 0.0, %v275
  %277 = vdwg.mxu0
  %v278 = vadd.f32 %v251, %v276
  %v279 = vxor.u32 %v278, 2147483648
  %v280 = vmul.f32 %v279, 1.442695
  %v281 = vpow.pop %v280
  %v282 = vadd.f32 %v281, 1.0
  %v283 = vrcp.pop %v282
  %v284 = vmul.f32 %v282, %v283
  %v285 = vsub.f32 1.0, %v284
  %v286 = vmul.f32 %v283, %v285
  %v287 = vadd.f32 %v283, %v286
  %vm288 = vweird.f32 %v282
  %vm289 = vweird.f32 %v283
  %vm290 = vmor %vm288, %vm289
  %v291 = vsel %vm290, %v283, %v287
  %v292 = vand.u32 2147483647, %v282
  %vm293 = vcmp.eq.f32.partialorder %v292, 8.507059e+37
  %v294 = vand.u32 %v282, 2147483648
  %v295 = vor.u32 1.1754944e-38, %v294
  %v296 = vsel %vm293, %v295, %v291
  %v297 = vmul.f32 1.0, %v296
  %v298 = vtanh.pop %v278
  %v299 = vmul.f32 %v297, %v227
  %301 = vrot.lane.b32.xlu0 %v298, 64
  %v302 = vpop.permute.xlu0 %301
  %v304 = vmul.f32 %v297, %v302
  %306 = vrot.lane.b32.xlu0 %v304, 32
  %v307 = vpop.permute.xlu0 %306
  %v309 = vadd.f32 %v299, %v307
  %v310 = vtanh.pop %v309
  %312 = vrot.lane.b32.xlu0 %v310, 64
  %v313 = vpop.permute.xlu0 %312
  %v315 = vmul.f32 %v297, %v313
  %v316 = vmul.f32 %v240, 0.7
  %317 = vrot.lane.b32.xlu0 %v235, 96
  %v318 = vpop.permute.xlu0 %317
  %v320 = vadd.f32 %v316, %v318
  %322 = vrot.lane.b32.xlu0 %v315, 32
  %v323 = vpop.permute.xlu0 %322
  %326 = vrot.lane.b32.xlu0 %v320, 32
  %v327 = vpop.permute.xlu0 %326
  %v329 = vsel %vm53, %v323, %v327
  %330 = vst.msk [vmem:[#allocation3 + $0x10] sm:$0xff] %vm167, %v329
  %v331 = vld [vmem:[#allocation2 + $0x18] sm:$0xff]
  %v332 = vld [vmem:[%s4] sm:$0xff]
  %v333 = vld [vmem:[%s4 + $0x8] sm:$0xff]
  %v334 = vld [vmem:[%s4 + $0x10] sm:$0xff]
  %v335 = vld [vmem:[%s4 + $0x18] sm:$0xff]
  %v336 = vsel %vm53, %v323, 0
  %338 = vmatpush.msra.mxu0 0.0
  %339 = vmatpush.msra.mxu0 0.0
  %340 = vmatpush.msra.mxu0 0.0
  %341 = vmatpush.msra.mxu0 0.0
  %342 = vmatpush.msra.mxu0 0.0
  %343 = vmatpush.msra.mxu0 0.0
  %344 = vmatpush.msra.mxu0 0.0
  %345 = vmatpush.msra.mxu0 0.0
  %346 = vmatpush.msra.mxu0 0.0
  %347 = vmatpush.msra.mxu0 0.0
  %348 = vmatpush.msra.mxu0 0.0
  %349 = vmatpush.msra.mxu0 0.0
  %350 = vmatpush.msra.mxu0 %v335
  %351 = vmatpush.msra.mxu0 %v334
  %352 = vmatpush.msra.mxu0 %v333
  %353 = vmatpush.msra.mxu0 %v332
  %354 = vmatmul.f32.gmra.mxu0 %v336
  %v355 = vpop.f32.mrf.mxu0
  %v356 = vadd.f32 0.0, %v355
  %357 = vdwg.mxu0
  %v358 = vadd.f32 %v331, %v356
  %v359 = vxor.u32 %v358, 2147483648
  %v360 = vmul.f32 %v359, 1.442695
  %v361 = vpow.pop %v360
  %v362 = vadd.f32 %v361, 1.0
  %v363 = vrcp.pop %v362
  %v364 = vmul.f32 %v362, %v363
  %v365 = vsub.f32 1.0, %v364
  %v366 = vmul.f32 %v363, %v365
  %v367 = vadd.f32 %v363, %v366
  %vm368 = vweird.f32 %v362
  %vm369 = vweird.f32 %v363
  %vm370 = vmor %vm368, %vm369
  %v371 = vsel %vm370, %v363, %v367
  %v372 = vand.u32 2147483647, %v362
  %vm373 = vcmp.eq.f32.partialorder %v372, 8.507059e+37
  %v374 = vand.u32 %v362, 2147483648
  %v375 = vor.u32 1.1754944e-38, %v374
  %v376 = vsel %vm373, %v375, %v371
  %v377 = vmul.f32 1.0, %v376
  %v378 = vtanh.pop %v358
  %v379 = vmul.f32 %v377, %v309
  %381 = vrot.lane.b32.xlu0 %v378, 64
  %v382 = vpop.permute.xlu0 %381
  %v384 = vmul.f32 %v377, %v382
  %386 = vrot.lane.b32.xlu0 %v384, 32
  %v387 = vpop.permute.xlu0 %386
  %v389 = vadd.f32 %v379, %v387
  %v390 = vtanh.pop %v389
  %392 = vrot.lane.b32.xlu0 %v390, 64
  %v393 = vpop.permute.xlu0 %392
  %v395 = vmul.f32 %v377, %v393
  %v396 = vmul.f32 %v320, 0.7
  %397 = vrot.lane.b32.xlu0 %v235, 80
  %v398 = vpop.permute.xlu0 %397
  %v400 = vadd.f32 %v396, %v398
  %402 = vrot.lane.b32.xlu0 %v395, 32
  %v403 = vpop.permute.xlu0 %402
  %406 = vrot.lane.b32.xlu0 %v400, 32
  %v407 = vpop.permute.xlu0 %406
  %v409 = vsel %vm53, %v403, %v407
  %410 = vst.msk [vmem:[#allocation3 + $0x18] sm:$0xff] %vm167, %v409
  %v411 = vld [vmem:[#allocation2 + $0x20] sm:$0xff]
  %v412 = vld [vmem:[%s4] sm:$0xff]
  %v413 = vld [vmem:[%s4 + $0x8] sm:$0xff]
  %v414 = vld [vmem:[%s4 + $0x10] sm:$0xff]
  %v415 = vld [vmem:[%s4 + $0x18] sm:$0xff]
  %v416 = vsel %vm53, %v403, 0
  %418 = vmatpush.msra.mxu0 0.0
  %419 = vmatpush.msra.mxu0 0.0
  %420 = vmatpush.msra.mxu0 0.0
  %421 = vmatpush.msra.mxu0 0.0
  %422 = vmatpush.msra.mxu0 0.0
  %423 = vmatpush.msra.mxu0 0.0
  %424 = vmatpush.msra.mxu0 0.0
  %425 = vmatpush.msra.mxu0 0.0
  %426 = vmatpush.msra.mxu0 0.0
  %427 = vmatpush.msra.mxu0 0.0
  %428 = vmatpush.msra.mxu0 0.0
  %429 = vmatpush.msra.mxu0 0.0
  %430 = vmatpush.msra.mxu0 %v415
  %431 = vmatpush.msra.mxu0 %v414
  %432 = vmatpush.msra.mxu0 %v413
  %433 = vmatpush.msra.mxu0 %v412
  %434 = vmatmul.f32.gmra.mxu0 %v416
  %v435 = vpop.f32.mrf.mxu0
  %v436 = vadd.f32 0.0, %v435
  %437 = vdwg.mxu0
  %v438 = vadd.f32 %v411, %v436
  %v439 = vxor.u32 %v438, 2147483648
  %v440 = vmul.f32 %v439, 1.442695
  %v441 = vpow.pop %v440
  %v442 = vadd.f32 %v441, 1.0
  %v443 = vrcp.pop %v442
  %v444 = vmul.f32 %v442, %v443
  %v445 = vsub.f32 1.0, %v444
  %v446 = vmul.f32 %v443, %v445
  %v447 = vadd.f32 %v443, %v446
  %vm448 = vweird.f32 %v442
  %vm449 = vweird.f32 %v443
  %vm450 = vmor %vm448, %vm449
  %v451 = vsel %vm450, %v443, %v447
  %v452 = vand.u32 2147483647, %v442
  %vm453 = vcmp.eq.f32.partialorder %v452, 8.507059e+37
  %v454 = vand.u32 %v442, 2147483648
  %v455 = vor.u32 1.1754944e-38, %v454
  %v456 = vsel %vm453, %v455, %v451
  %v457 = vmul.f32 1.0, %v456
  %v458 = vtanh.pop %v438
  %v459 = vmul.f32 %v457, %v389
  %461 = vrot.lane.b32.xlu0 %v458, 64
  %v462 = vpop.permute.xlu0 %461
  %v464 = vmul.f32 %v457, %v462
  %466 = vrot.lane.b32.xlu0 %v464, 32
  %v467 = vpop.permute.xlu0 %466
  %v469 = vadd.f32 %v459, %v467
  %v470 = vtanh.pop %v469
  %472 = vrot.lane.b32.xlu0 %v470, 64
  %v473 = vpop.permute.xlu0 %472
  %v475 = vmul.f32 %v457, %v473
  %v476 = vmul.f32 %v400, 0.7
  %477 = vrot.lane.b32.xlu0 %v235, 64
  %v478 = vpop.permute.xlu0 %477
  %v480 = vadd.f32 %v476, %v478
  %482 = vrot.lane.b32.xlu0 %v475, 32
  %v483 = vpop.permute.xlu0 %482
  %486 = vrot.lane.b32.xlu0 %v480, 32
  %v487 = vpop.permute.xlu0 %486
  %v489 = vsel %vm53, %v483, %v487
  %490 = vst.msk [vmem:[#allocation3 + $0x20] sm:$0xff] %vm167, %v489
  %v491 = vld [vmem:[#allocation2 + $0x28] sm:$0xff]
  %v492 = vld [vmem:[%s4] sm:$0xff]
  %v493 = vld [vmem:[%s4 + $0x8] sm:$0xff]
  %v494 = vld [vmem:[%s4 + $0x10] sm:$0xff]
  %v495 = vld [vmem:[%s4 + $0x18] sm:$0xff]
  %v496 = vsel %vm53, %v483, 0
  %498 = vmatpush.msra.mxu0 0.0
  %499 = vmatpush.msra.mxu0 0.0
  %500 = vmatpush.msra.mxu0 0.0
  %501 = vmatpush.msra.mxu0 0.0
  %502 = vmatpush.msra.mxu0 0.0
  %503 = vmatpush.msra.mxu0 0.0
  %504 = vmatpush.msra.mxu0 0.0
  %505 = vmatpush.msra.mxu0 0.0
  %506 = vmatpush.msra.mxu0 0.0
  %507 = vmatpush.msra.mxu0 0.0
  %508 = vmatpush.msra.mxu0 0.0
  %509 = vmatpush.msra.mxu0 0.0
  %510 = vmatpush.msra.mxu0 %v495
  %511 = vmatpush.msra.mxu0 %v494
  %512 = vmatpush.msra.mxu0 %v493
  %513 = vmatpush.msra.mxu0 %v492
  %514 = vmatmul.f32.gmra.mxu0 %v496
  %v515 = vpop.f32.mrf.mxu0
  %v516 = vadd.f32 0.0, %v515
  %517 = vdwg.mxu0
  %v518 = vadd.f32 %v491, %v516
  %v519 = vxor.u32 %v518, 2147483648
  %v520 = vmul.f32 %v519, 1.442695
  %v521 = vpow.pop %v520
  %v522 = vadd.f32 %v521, 1.0
  %v523 = vrcp.pop %v522
  %v524 = vmul.f32 %v522, %v523
  %v525 = vsub.f32 1.0, %v524
  %v526 = vmul.f32 %v523, %v525
  %v527 = vadd.f32 %v523, %v526
  %vm528 = vweird.f32 %v522
  %vm529 = vweird.f32 %v523
  %vm530 = vmor %vm528, %vm529
  %v531 = vsel %vm530, %v523, %v527
  %v532 = vand.u32 2147483647, %v522
  %vm533 = vcmp.eq.f32.partialorder %v532, 8.507059e+37
  %v534 = vand.u32 %v522, 2147483648
  %v535 = vor.u32 1.1754944e-38, %v534
  %v536 = vsel %vm533, %v535, %v531
  %v537 = vmul.f32 1.0, %v536
  %v538 = vtanh.pop %v518
  %v539 = vmul.f32 %v537, %v469
  %541 = vrot.lane.b32.xlu0 %v538, 64
  %v542 = vpop.permute.xlu0 %541
  %v544 = vmul.f32 %v537, %v542
  %546 = vrot.lane.b32.xlu0 %v544, 32
  %v547 = vpop.permute.xlu0 %546
  %v549 = vadd.f32 %v539, %v547
  %v550 = vtanh.pop %v549
  %552 = vrot.lane.b32.xlu0 %v550, 64
  %v553 = vpop.permute.xlu0 %552
  %v555 = vmul.f32 %v537, %v553
  %v556 = vmul.f32 %v480, 0.7
  %557 = vrot.lane.b32.xlu0 %v235, 48
  %v558 = vpop.permute.xlu0 %557
  %v560 = vadd.f32 %v556, %v558
  %562 = vrot.lane.b32.xlu0 %v555, 32
  %v563 = vpop.permute.xlu0 %562
  %566 = vrot.lane.b32.xlu0 %v560, 32
  %v567 = vpop.permute.xlu0 %566
  %v569 = vsel %vm53, %v563, %v567
  %570 = vst.msk [vmem:[#allocation3 + $0x28] sm:$0xff] %vm167, %v569
  %v571 = vld [vmem:[#allocation2 + $0x30] sm:$0xff]
  %v572 = vld [vmem:[%s4] sm:$0xff]
  %v573 = vld [vmem:[%s4 + $0x8] sm:$0xff]
  %v574 = vld [vmem:[%s4 + $0x10] sm:$0xff]
  %v575 = vld [vmem:[%s4 + $0x18] sm:$0xff]
  %v576 = vsel %vm53, %v563, 0
  %578 = vmatpush.msra.mxu0 0.0
  %579 = vmatpush.msra.mxu0 0.0
  %580 = vmatpush.msra.mxu0 0.0
  %581 = vmatpush.msra.mxu0 0.0
  %582 = vmatpush.msra.mxu0 0.0
  %583 = vmatpush.msra.mxu0 0.0
  %584 = vmatpush.msra.mxu0 0.0
  %585 = vmatpush.msra.mxu0 0.0
  %586 = vmatpush.msra.mxu0 0.0
  %587 = vmatpush.msra.mxu0 0.0
  %588 = vmatpush.msra.mxu0 0.0
  %589 = vmatpush.msra.mxu0 0.0
  %590 = vmatpush.msra.mxu0 %v575
  %591 = vmatpush.msra.mxu0 %v574
  %592 = vmatpush.msra.mxu0 %v573
  %593 = vmatpush.msra.mxu0 %v572
  %594 = vmatmul.f32.gmra.mxu0 %v576
  %v595 = vpop.f32.mrf.mxu0
  %v596 = vadd.f32 0.0, %v595
  %597 = vdwg.mxu0
  %v598 = vadd.f32 %v571, %v596
  %v599 = vxor.u32 %v598, 2147483648
  %v600 = vmul.f32 %v599, 1.442695
  %v601 = vpow.pop %v600
  %v602 = vadd.f32 %v601, 1.0
  %v603 = vrcp.pop %v602
  %v604 = vmul.f32 %v602, %v603
  %v605 = vsub.f32 1.0, %v604
  %v606 = vmul.f32 %v603, %v605
  %v607 = vadd.f32 %v603, %v606
  %vm608 = vweird.f32 %v602
  %vm609 = vweird.f32 %v603
  %vm610 = vmor %vm608, %vm609
  %v611 = vsel %vm610, %v603, %v607
  %v612 = vand.u32 2147483647, %v602
  %vm613 = vcmp.eq.f32.partialorder %v612, 8.507059e+37
  %v614 = vand.u32 %v602, 2147483648
  %v615 = vor.u32 1.1754944e-38, %v614
  %v616 = vsel %vm613, %v615, %v611
  %v617 = vmul.f32 1.0, %v616
  %v618 = vtanh.pop %v598
  %v619 = vmul.f32 %v617, %v549
  %621 = vrot.lane.b32.xlu0 %v618, 64
  %v622 = vpop.permute.xlu0 %621
  %v624 = vmul.f32 %v617, %v622
  %626 = vrot.lane.b32.xlu0 %v624, 32
  %v627 = vpop.permute.xlu0 %626
  %v629 = vadd.f32 %v619, %v627
  %v630 = vtanh.pop %v629
  %632 = vrot.lane.b32.xlu0 %v630, 64
  %v633 = vpop.permute.xlu0 %632
  %v635 = vmul.f32 %v617, %v633
  %v636 = vmul.f32 %v560, 0.7
  %637 = vrot.lane.b32.xlu0 %v235, 32
  %v638 = vpop.permute.xlu0 %637
  %v640 = vadd.f32 %v636, %v638
  %642 = vrot.lane.b32.xlu0 %v635, 32
  %v643 = vpop.permute.xlu0 %642
  %646 = vrot.lane.b32.xlu0 %v640, 32
  %v647 = vpop.permute.xlu0 %646
  %v649 = vsel %vm53, %v643, %v647
  %650 = vst.msk [vmem:[#allocation3 + $0x30] sm:$0xff] %vm167, %v649
  %v651 = vld [vmem:[#allocation2 + $0x38] sm:$0xff]
  %v652 = vld [vmem:[%s4] sm:$0xff]
  %v653 = vld [vmem:[%s4 + $0x8] sm:$0xff]
  %v654 = vld [vmem:[%s4 + $0x10] sm:$0xff]
  %v655 = vld [vmem:[%s4 + $0x18] sm:$0xff]
  %v656 = vsel %vm53, %v643, 0
  %658 = vmatpush.msra.mxu0 0.0
  %659 = vmatpush.msra.mxu0 0.0
  %660 = vmatpush.msra.mxu0 0.0
  %661 = vmatpush.msra.mxu0 0.0
  %662 = vmatpush.msra.mxu0 0.0
  %663 = vmatpush.msra.mxu0 0.0
  %664 = vmatpush.msra.mxu0 0.0
  %665 = vmatpush.msra.mxu0 0.0
  %666 = vmatpush.msra.mxu0 0.0
  %667 = vmatpush.msra.mxu0 0.0
  %668 = vmatpush.msra.mxu0 0.0
  %669 = vmatpush.msra.mxu0 0.0
  %670 = vmatpush.msra.mxu0 %v655
  %671 = vmatpush.msra.mxu0 %v654
  %672 = vmatpush.msra.mxu0 %v653
  %673 = vmatpush.msra.mxu0 %v652
  %674 = vmatmul.f32.gmra.mxu0 %v656
  %v675 = vpop.f32.mrf.mxu0
  %v676 = vadd.f32 0.0, %v675
  %677 = vdwg.mxu0
  %v678 = vadd.f32 %v651, %v676
  %v679 = vxor.u32 %v678, 2147483648
  %v680 = vmul.f32 %v679, 1.442695
  %v681 = vpow.pop %v680
  %v682 = vadd.f32 %v681, 1.0
  %v683 = vrcp.pop %v682
  %v684 = vmul.f32 %v682, %v683
  %v685 = vsub.f32 1.0, %v684
  %v686 = vmul.f32 %v683, %v685
  %v687 = vadd.f32 %v683, %v686
  %vm688 = vweird.f32 %v682
  %vm689 = vweird.f32 %v683
  %vm690 = vmor %vm688, %vm689
  %v691 = vsel %vm690, %v683, %v687
  %v692 = vand.u32 2147483647, %v682
  %vm693 = vcmp.eq.f32.partialorder %v692, 8.507059e+37
  %v694 = vand.u32 %v682, 2147483648
  %v695 = vor.u32 1.1754944e-38, %v694
  %v696 = vsel %vm693, %v695, %v691
  %v697 = vmul.f32 1.0, %v696
  %v698 = vtanh.pop %v678
  %v699 = vmul.f32 %v697, %v629
  %701 = vrot.lane.b32.xlu0 %v698, 64
  %v702 = vpop.permute.xlu0 %701
  %v704 = vmul.f32 %v697, %v702
  %706 = vrot.lane.b32.xlu0 %v704, 32
  %v707 = vpop.permute.xlu0 %706
  %v709 = vadd.f32 %v699, %v707
  %v710 = vtanh.pop %v709
  %712 = vrot.lane.b32.xlu0 %v710, 64
  %v713 = vpop.permute.xlu0 %712
  %v715 = vmul.f32 %v697, %v713
  %v716 = vmul.f32 %v640, 0.7
  %717 = vrot.lane.b32.xlu0 %v235, 16
  %v718 = vpop.permute.xlu0 %717
  %v720 = vadd.f32 %v716, %v718
  %722 = vrot.lane.b32.xlu0 %v715, 32
  %v723 = vpop.permute.xlu0 %722
  %726 = vrot.lane.b32.xlu0 %v720, 32
  %v727 = vpop.permute.xlu0 %726
  %v729 = vsel %vm53, %v723, %v727
  %730 = vst.msk [vmem:[#allocation3 + $0x38] sm:$0xff] %vm167, %v729
  %v731 = vld [vmem:[#allocation3] sm:$0xff]
  %v732 = vld [vmem:[#allocation3 + $0x8] sm:$0xff]
  %v733 = vld [vmem:[#allocation3 + $0x10] sm:$0xff]
  %v734 = vld [vmem:[#allocation3 + $0x18] sm:$0xff]
  %v735 = vld [vmem:[#allocation3 + $0x20] sm:$0xff]
  %v736 = vld [vmem:[#allocation3 + $0x28] sm:$0xff]
  %v737 = vld [vmem:[#allocation3 + $0x30] sm:$0xff]
  %v738 = vld [vmem:[#allocation3 + $0x38] sm:$0xff]
  %v739 = vld [vmem:[%s6] sm:$0xff]
  %v740 = vld [vmem:[%s6 + $0x8] sm:$0xff]
  %v741 = vld [vmem:[%s6 + $0x10] sm:$0xff]
  %v742 = vld [vmem:[%s6 + $0x18] sm:$0xff]
  %v743 = vld [vmem:[%s6 + $0x20] sm:$0xff]
  %v744 = vld [vmem:[%s6 + $0x28] sm:$0xff]
  %v746 = vsel %vm167, %v731, 0
  %v749 = vsel %vm167, %v732, 0
  %v752 = vsel %vm167, %v733, 0
  %v755 = vsel %vm167, %v734, 0
  %v758 = vsel %vm167, %v735, 0
  %v761 = vsel %vm167, %v736, 0
  %v764 = vsel %vm167, %v737, 0
  %v767 = vsel %vm167, %v738, 0
  %769 = vmatpush.msra.mxu0 0.0
  %770 = vmatpush.msra.mxu0 0.0
  %771 = vmatpush.msra.mxu0 0.0
  %772 = vmatpush.msra.mxu0 0.0
  %773 = vmatpush.msra.mxu0 0.0
  %774 = vmatpush.msra.mxu0 0.0
  %775 = vmatpush.msra.mxu0 0.0
  %776 = vmatpush.msra.mxu0 0.0
  %777 = vmatpush.msra.mxu0 0.0
  %778 = vmatpush.msra.mxu0 0.0
  %779 = vmatpush.msra.mxu0 %v744
  %780 = vmatpush.msra.mxu0 %v743
  %781 = vmatpush.msra.mxu0 %v742
  %782 = vmatpush.msra.mxu0 %v741
  %783 = vmatpush.msra.mxu0 %v740
  %784 = vmatpush.msra.mxu0 %v739
  %785 = vmatmul.f32.gmra.mxu0 %v746
  %v786 = vpop.f32.mrf.mxu0
  %v787 = vadd.f32 0.0, %v786
  %788 = vmatmul.f32.gmra.mxu0 %v749
  %v789 = vpop.f32.mrf.mxu0
  %v790 = vadd.f32 0.0, %v789
  %791 = vmatmul.f32.gmra.mxu0 %v752
  %v792 = vpop.f32.mrf.mxu0
  %v793 = vadd.f32 0.0, %v792
  %794 = vmatmul.f32.gmra.mxu0 %v755
  %v795 = vpop.f32.mrf.mxu0
  %v796 = vadd.f32 0.0, %v795
  %797 = vmatmul.f32.gmra.mxu0 %v758
  %v798 = vpop.f32.mrf.mxu0
  %v799 = vadd.f32 0.0, %v798
  %800 = vmatmul.f32.gmra.mxu0 %v761
  %v801 = vpop.f32.mrf.mxu0
  %v802 = vadd.f32 0.0, %v801
  %803 = vmatmul.f32.gmra.mxu0 %v764
  %v804 = vpop.f32.mrf.mxu0
  %v805 = vadd.f32 0.0, %v804
  %806 = vmatmul.f32.gmra.mxu0 %v767
  %v807 = vpop.f32.mrf.mxu0
  %v808 = vadd.f32 0.0, %v807
  %809 = vdwg.mxu0
  %v810 = vld [vmem:[%s2] sm:$0xff]
  %v811 = vld [vmem:[%s7] sm:$0x1]
  %vm812 = vcmp.gt.s32.totalorder %v810, 0
  %v813 = vsel %vm812, 1, 0
  %814 = vset.pattern.permute.xlu0 0
  %815 = vperm.xlu0 %814, %v813
  %v816 = vpop.permute.xlu0 %815
  %vm817 = vcmp.eq.s32.totalorder %v816, 1
  %v818 = vsel %vm817, %v787, 0.0
  %v820 = vperm.slane %v811, 0
  %v822 = vadd.f32 %v818, %v820
  %vm823 = vcmp.gt.s32.totalorder %v810, 1
  %v824 = vsel %vm823, 1, 0
  %825 = vset.pattern.permute.xlu0 0
  %826 = vperm.xlu0 %825, %v824
  %v827 = vpop.permute.xlu0 %826
  %vm828 = vcmp.eq.s32.totalorder %v827, 1
  %v829 = vsel %vm828, %v790, 0.0
  %v830 = vadd.f32 %v829, %v820
  %vm831 = vcmp.gt.s32.totalorder %v810, 2
  %v832 = vsel %vm831, 1, 0
  %833 = vset.pattern.permute.xlu0 0
  %834 = vperm.xlu0 %833, %v832
  %v835 = vpop.permute.xlu0 %834
  %vm836 = vcmp.eq.s32.totalorder %v835, 1
  %v837 = vsel %vm836, %v793, 0.0
  %v838 = vadd.f32 %v837, %v820
  %vm839 = vcmp.gt.s32.totalorder %v810, 3
  %v840 = vsel %vm839, 1, 0
  %841 = vset.pattern.permute.xlu0 0
  %842 = vperm.xlu0 %841, %v840
  %v843 = vpop.permute.xlu0 %842
  %vm844 = vcmp.eq.s32.totalorder %v843, 1
  %v845 = vsel %vm844, %v796, 0.0
  %v846 = vadd.f32 %v845, %v820
  %vm847 = vcmp.gt.s32.totalorder %v810, 4
  %v848 = vsel %vm847, 1, 0
  %849 = vset.pattern.permute.xlu0 0
  %850 = vperm.xlu0 %849, %v848
  %v851 = vpop.permute.xlu0 %850
  %vm852 = vcmp.eq.s32.totalorder %v851, 1
  %v853 = vsel %vm852, %v799, 0.0
  %v854 = vadd.f32 %v853, %v820
  %vm855 = vcmp.gt.s32.totalorder %v810, 5
  %v856 = vsel %vm855, 1, 0
  %857 = vset.pattern.permute.xlu0 0
  %858 = vperm.xlu0 %857, %v856
  %v859 = vpop.permute.xlu0 %858
  %vm860 = vcmp.eq.s32.totalorder %v859, 1
  %v861 = vsel %vm860, %v802, 0.0
  %v862 = vadd.f32 %v861, %v820
  %vm863 = vcmp.gt.s32.totalorder %v810, 6
  %v864 = vsel %vm863, 1, 0
  %865 = vset.pattern.permute.xlu0 0
  %866 = vperm.xlu0 %865, %v864
  %v867 = vpop.permute.xlu0 %866
  %vm868 = vcmp.eq.s32.totalorder %v867, 1
  %v869 = vsel %vm868, %v805, 0.0
  %v870 = vadd.f32 %v869, %v820
  %vm871 = vcmp.gt.s32.totalorder %v810, 7
  %v872 = vsel %vm871, 1, 0
  %873 = vset.pattern.permute.xlu0 0
  %874 = vperm.xlu0 %873, %v872
  %v875 = vpop.permute.xlu0 %874
  %vm876 = vcmp.eq.s32.totalorder %v875, 1
  %v877 = vsel %vm876, %v808, 0.0
  %v878 = vadd.f32 %v877, %v820
  %880 = vrot.lane.b32.xlu0 %v830, 32
  %v881 = vpop.permute.xlu0 %880
  %884 = vrot.lane.b32.xlu0 %v838, 64
  %v885 = vpop.permute.xlu0 %884
  %888 = vrot.lane.b32.xlu0 %v846, 96
  %v889 = vpop.permute.xlu0 %888
  %892 = vrot.lane.b32.xlu0 %v862, 32
  %v893 = vpop.permute.xlu0 %892
  %896 = vrot.lane.b32.xlu0 %v870, 64
  %v897 = vpop.permute.xlu0 %896
  %900 = vrot.lane.b32.xlu0 %v878, 96
  %v901 = vpop.permute.xlu0 %900
  %v903 = vsel %vm53, %v822, %v881
  %vm904 = vcmask 523264
  %v905 = vsel %vm904, %v903, %v885
  %vm906 = vcmask 785408
  %v907 = vsel %vm906, %v905, %v889
  %v908 = vsel %vm53, %v854, %v893
  %v909 = vsel %vm904, %v908, %v897
  %v910 = vsel %vm906, %v909, %v901
  %911 = vst [vmem:[%s8] sm:$0xff] %v907
  %912 = vst [vmem:[%s8 + $0x8] sm:$0xff] %v910
  // Predicated region
  $region34: #{naver_forward.1} parent=0 // pred_check
    _
  $region35: #{naver_forward.1} parent=0 // pred_check_branch
    %914 = sbr.rel (0) target = $region37
  $region36: #{naver_forward.1} parent=0 // pred_region
    _
  $region37: #{naver_forward.1} parent=0 // pred_fallthru
    _
  // Predicated region
  $region38: #{naver_forward.1} parent=0 // pred_check
    _
  $region39: #{naver_forward.1} parent=0 // pred_check_branch
    %916 = sbr.rel (0) target = $region41
  $region40: #{naver_forward.1} parent=0 // pred_region
    _
  $region41: #{naver_forward.1} parent=0 // pred_fallthru
    _

</llo_original>
